<compile_context>
chip_gen: v6e
topology: v6e:2x2x1
jax: 0.10.0
libtpu: 0.0.40
codegen_flags: <defaults>
</compile_context>

<pallas_src>
import functools

import jax
import jax.numpy as jnp
from jax.experimental import pallas as pl
from jax.experimental.pallas import tpu as pltpu

BN_EPS = 1e-5


def _round_up(x, m):
    return (x + m - 1) // m * m


def _vmem_limit_bytes():
    """Generation-aware VMEM limit: ~75% of physical capacity, capped at
    112 MiB (so ~96 MiB on 128 MiB v5e/v6e, ~48 MiB on 64 MiB v7x).  Falls
    back to 48 MiB when hardware info is unavailable (e.g. interpret mode)."""
    default = 48 * 1024 * 1024
    try:
        info = pltpu.get_tpu_info()
        cap = getattr(info, "vmem_capacity_bytes", None)
        if not cap:
            return default
        return int(min(cap * 3 // 4, 112 * 1024 * 1024))
    except Exception:
        return default


def _pick_tm(batch):
    """Batch tile: as large as possible (fewer W1 re-streams / fuller MXU),
    multiple of 16 (bf16 sublane packing), ragged-tile waste kept <= ~25%."""
    if batch <= 512:
        return _round_up(batch, 16)
    for t in (512, 384, 256, 128):
        padded = _round_up(batch, t)
        if (padded - batch) * 4 <= padded:      # <= 25% padded rows
            return t
    return 128


def _k1_vmem_estimate(tm, tk, f_pad, h_pad, mxu_bytes=2):
    """Rough per-step VMEM footprint of kernel 1 (double-buffered I/O)."""
    x_buf = 2 * tm * tk * mxu_bytes
    w1_buf = 2 * tk * f_pad * mxu_bytes
    wp1_buf = 2 * f_pad * h_pad * mxu_bytes
    bias_buf = 2 * (f_pad + 2 * h_pad) * 4
    z_buf = 2 * tm * h_pad * mxu_bytes
    stat_buf = 4 * 2 * h_pad * 4
    acc = tm * f_pad * 4
    return x_buf + w1_buf + wp1_buf + bias_buf + z_buf + stat_buf + acc


# ---------------------------------------------------------------------------
# Kernel 1: base encoder up to the hooked ReLU + projector Linear 1,
#           plus masked partial BatchNorm statistics per batch tile.
# grid = (M_tiles, K_tiles); K (flattened input features) is the reduction.
# ---------------------------------------------------------------------------
def _encode_proj1_kernel(x_ref, w1_ref, b1_ref, wp1_ref, bp1_ref,
                         z_ref, s1_ref, s2_ref, acc_ref, *, b_real):
    # program_id / num_programs bound at top level (NOT inside pl.when bodies);
    # only their values flow into the conditional branches below.
    m = pl.program_id(0)
    k = pl.program_id(1)
    k_last = pl.num_programs(1) - 1

    @pl.when(k == 0)
    def _init():
        acc_ref[...] = jnp.zeros_like(acc_ref)

    # bf16 x bf16 -> f32 accumulate on the MXU.
    acc_ref[...] += jnp.dot(x_ref[...], w1_ref[...],
                            preferred_element_type=jnp.float32)

    @pl.when(k == k_last)
    def _finalize():
        tm = acc_ref.shape[0]
        # Hooked layer output: ReLU of the first Linear (f32 elementwise).
        h = jnp.maximum(acc_ref[...] + b1_ref[...], 0.0)
        # hook: output.flatten(start_dim=1) is a no-op on a (TM, F) tile.
        # Projector Linear 1 (bf16 MXU operands, f32 accumulate + bias).
        z = jnp.dot(h.astype(wp1_ref.dtype), wp1_ref[...],
                    preferred_element_type=jnp.float32) + bp1_ref[...]
        # Masked partial sums for the BatchNorm batch statistics; padded batch
        # rows (>= b_real) must not contribute.
        row_ids = m * tm + jax.lax.broadcasted_iota(jnp.int32, z.shape, 0)
        zm = jnp.where(row_ids < b_real, z, 0.0)
        s1_ref[...] = jnp.sum(zm, axis=0, keepdims=True)[None, :, :]
        s2_ref[...] = jnp.sum(zm * z, axis=0, keepdims=True)[None, :, :]
        z_ref[...] = z.astype(z_ref.dtype)     # bf16 round-trip of z


# ---------------------------------------------------------------------------
# Kernel 2: BatchNorm (folded scale/shift) + ReLU + projector Linear 2.
# ---------------------------------------------------------------------------
def _bn_proj2_kernel(z_ref, scale_ref, shift_ref, wp2_ref, bp2_ref, out_ref):
    z = z_ref[...].astype(jnp.float32)
    zr = jnp.maximum(z * scale_ref[...] + shift_ref[...], 0.0)
    out_ref[...] = (jnp.dot(zr.astype(wp2_ref.dtype), wp2_ref[...],
                            preferred_element_type=jnp.float32)
                    + bp2_ref[...]).astype(out_ref.dtype)


# ---------------------------------------------------------------------------
# One-time parameter preparation (padding + bf16 cast hoisted out of forward).
# ---------------------------------------------------------------------------
def prepare_encoder_params(params, *, mxu_dtype=jnp.bfloat16):
    w1, b1 = params["w1"], params["b1"]
    wp1, bp1 = params["wp1"], params["bp1"]
    wp2, bp2 = params["wp2"], params["bp2"]
    gamma, beta = params["gamma"], params["beta"]
    d_in, feat = w1.shape
    hidden = wp1.shape[1]
    proj = wp2.shape[1]

    f_pad = _round_up(feat, 128)
    h_pad = _round_up(hidden, 128)
    p_pad = _round_up(proj, 128)

    # K tiling: pad D_in only to the 128-lane boundary, then pick the largest
    # tile (<= 512) that divides it exactly -> no overshoot on the last K tile.
    d_pad = _round_up(d_in, 128)
    tk = 128
    for cand in (512, 384, 256, 128):
        if d_pad % cand == 0:
            tk = cand
            break

    def pad2(a, r, c):
        return jnp.pad(a, ((0, r - a.shape[0]), (0, c - a.shape[1])))

    def pad_row(a, c):                       # 1-D bias -> (1, c) f32
        return jnp.pad(a.astype(jnp.float32), (0, c - a.shape[0]))[None, :]

    return dict(
        d_in=d_in, feat=feat, hidden=hidden, proj=proj,
        d_pad=d_pad, f_pad=f_pad, h_pad=h_pad, p_pad=p_pad, tk=tk,
        mxu_dtype=mxu_dtype,
        w1=pad2(w1, d_pad, f_pad).astype(mxu_dtype),
        wp1=pad2(wp1, f_pad, h_pad).astype(mxu_dtype),
        wp2=pad2(wp2, h_pad, p_pad).astype(mxu_dtype),
        b1=pad_row(b1, f_pad),
        bp1=pad_row(bp1, h_pad),
        bp2=pad_row(bp2, p_pad),
        gamma=jnp.pad(gamma.astype(jnp.float32), (0, h_pad - hidden)),
        beta=jnp.pad(beta.astype(jnp.float32), (0, h_pad - hidden)),
    )


def encoder_wrapper_forward(x_nchw, prep):
    """EncoderWrapper.forward. x_nchw: (B, C, H, W) f32 -> (B, projection) f32."""
    B = x_nchw.shape[0]
    x = x_nchw.reshape(B, -1).astype(jnp.float32)   # torch .flatten(start_dim=1)
    if x.shape[1] != prep["d_in"]:
        raise ValueError("input feature size does not match prepared params")

    mxu_dtype = prep["mxu_dtype"]
    d_pad, f_pad = prep["d_pad"], prep["f_pad"]
    h_pad, p_pad = prep["h_pad"], prep["p_pad"]
    tk = prep["tk"]
    proj = prep["proj"]

    vmem_limit = _vmem_limit_bytes()
    tm = _pick_tm(B)
    while tm > 16 and _k1_vmem_estimate(tm, tk, f_pad, h_pad) > vmem_limit:
        tm = max(16, _round_up(tm // 2, 16))
    b_pad = _round_up(B, tm)
    m_tiles = b_pad // tm
    k_tiles = d_pad // tk

    x_p = jnp.pad(x, ((0, b_pad - B), (0, d_pad - x.shape[1]))).astype(mxu_dtype)

    # ---- phase 1: h = ReLU(x@W1 + b1); z = h@Wp1 + bp1; partial BN sums ----
    z_p, s1_parts, s2_parts = pl.pallas_call(
        functools.partial(_encode_proj1_kernel, b_real=B),
        out_shape=(
            jax.ShapeDtypeStruct((b_pad, h_pad), mxu_dtype),
            jax.ShapeDtypeStruct((m_tiles, 1, h_pad), jnp.float32),
            jax.ShapeDtypeStruct((m_tiles, 1, h_pad), jnp.float32),
        ),
        grid_spec=pltpu.PrefetchScalarGridSpec(
            num_scalar_prefetch=0,
            grid=(m_tiles, k_tiles),
            in_specs=[
                pl.BlockSpec((tm, tk), lambda m, k: (m, k)),        # x tile
                pl.BlockSpec((tk, f_pad), lambda m, k: (k, 0)),     # W1 K-slab
                pl.BlockSpec((1, f_pad), lambda m, k: (0, 0)),      # b1 (resident)
                pl.BlockSpec((f_pad, h_pad), lambda m, k: (0, 0)),  # Wp1 (resident)
                pl.BlockSpec((1, h_pad), lambda m, k: (0, 0)),      # bp1 (resident)
            ],
            out_specs=(
                pl.BlockSpec((tm, h_pad), lambda m, k: (m, 0)),
                pl.BlockSpec((1, 1, h_pad), lambda m, k: (m, 0, 0)),
                pl.BlockSpec((1, 1, h_pad), lambda m, k: (m, 0, 0)),
            ),
            scratch_shapes=[pltpu.VMEM((tm, f_pad), jnp.float32)],
        ),
        compiler_params=pltpu.CompilerParams(
            dimension_semantics=("parallel", "arbitrary"),
            vmem_limit_bytes=vmem_limit),
    )(x_p, prep["w1"], prep["b1"], prep["wp1"], prep["bp1"])

    # ---- BatchNorm1d (training mode) statistics over the FULL real batch ----
    # Tiny O(hidden) math, folded into a single per-feature scale/shift.
    # Note: one-pass variance E[z^2]-E[z]^2 (clamped at 0); acceptable at the
    # bf16 tolerance already used for the MXU operands.
    s1 = jnp.sum(s1_parts, axis=(0, 1))
    s2 = jnp.sum(s2_parts, axis=(0, 1))
    mean = s1 / B
    var = jnp.maximum(s2 / B - mean * mean, 0.0)       # biased batch variance
    inv = jax.lax.rsqrt(var + BN_EPS)
    scale = (prep["gamma"] * inv)[None, :]
    shift = (prep["beta"] - mean * prep["gamma"] * inv)[None, :]

    # ---- phase 2: normalize + ReLU + projector Linear 2 ----
    out_p = pl.pallas_call(
        _bn_proj2_kernel,
        out_shape=jax.ShapeDtypeStruct((b_pad, p_pad), jnp.float32),
        grid_spec=pltpu.PrefetchScalarGridSpec(
            num_scalar_prefetch=0,
            grid=(m_tiles,),
            in_specs=[
                pl.BlockSpec((tm, h_pad), lambda m: (m, 0)),
                pl.BlockSpec((1, h_pad), lambda m: (0, 0)),
                pl.BlockSpec((1, h_pad), lambda m: (0, 0)),
                pl.BlockSpec((h_pad, p_pad), lambda m: (0, 0)),
                pl.BlockSpec((1, p_pad), lambda m: (0, 0)),
            ],
            out_specs=pl.BlockSpec((tm, p_pad), lambda m: (m, 0)),
        ),
        compiler_params=pltpu.CompilerParams(
            dimension_semantics=("parallel",),
            vmem_limit_bytes=vmem_limit),
    )(z_p, scale, shift, prep["wp2"], prep["bp2"])

    return out_p[:B, :proj]


def _make_params(key, d_in, feat, hidden, proj):
    ks = jax.random.split(key, 3)

    def lin(k, fan_in, fan_out):
        bound = 1.0 / jnp.sqrt(jnp.float32(fan_in))
        kw, kb = jax.random.split(k)
        w = jax.random.uniform(kw, (fan_in, fan_out), jnp.float32, -bound, bound)
        b = jax.random.uniform(kb, (fan_out,), jnp.float32, -bound, bound)
        return w, b

    w1, b1 = lin(ks[0], d_in, feat)       # base-model Linear feeding the hooked ReLU
    wp1, bp1 = lin(ks[1], feat, hidden)   # projector Linear 1
    wp2, bp2 = lin(ks[2], hidden, proj)   # projector Linear 2
    return dict(w1=w1, b1=b1, wp1=wp1, bp1=bp1,
                gamma=jnp.ones((hidden,), jnp.float32),   # BatchNorm1d weight init
                beta=jnp.zeros((hidden,), jnp.float32),   # BatchNorm1d bias init
                wp2=wp2, bp2=bp2)


def _reference(x_nchw, p, mxu_dtype=jnp.bfloat16):
    """Pure-JAX reference mirroring the kernel numerics: bf16 MXU operands with
    f32 accumulation, BN stats from the f32 z, z stored in bf16 between the two
    kernels, PyTorch training-mode BatchNorm1d (biased variance, eps=1e-5)."""
    B = x_nchw.shape[0]
    x = x_nchw.reshape(B, -1)
    h = jnp.maximum(
        jnp.dot(x.astype(mxu_dtype), p["w1"].astype(mxu_dtype),
                preferred_element_type=jnp.float32) + p["b1"], 0.0)
    z = jnp.dot(h.astype(mxu_dtype), p["wp1"].astype(mxu_dtype),
                preferred_element_type=jnp.float32) + p["bp1"]
    mean = jnp.sum(z, axis=0) / B
    var = jnp.maximum(jnp.sum(z * z, axis=0) / B - mean * mean, 0.0)
    inv = jax.lax.rsqrt(var + BN_EPS)
    zq = z.astype(mxu_dtype).astype(jnp.float32)   # kernel stores z in bf16
    zr = jnp.maximum((zq - mean) * inv * p["gamma"] + p["beta"], 0.0)
    return jnp.dot(zr.astype(mxu_dtype), p["wp2"].astype(mxu_dtype),
                   preferred_element_type=jnp.float32) + p["bp2"]


if __name__ == "__main__":
    # Small shapes: batch=2, channels=4, spatial=16x16 -> D_in=1024
    B, C, H, W = 2, 4, 16, 16
    FEAT, HIDDEN, PROJ = 64, 32, 16   # encoder feature dim, hidden_size, projection_size

    key = jax.random.PRNGKey(0)
    kx, kp = jax.random.split(key)
    x = jax.random.normal(kx, (B, C, H, W), jnp.float32)
    params = _make_params(kp, C * H * W, FEAT, HIDDEN, PROJ)

    prep = prepare_encoder_params(params)                 # one-time pad + cast
    out = jax.block_until_ready(encoder_wrapper_forward(x, prep))
    ref = jax.block_until_ready(_reference(x, params))

    assert out.shape == (B, PROJ)
    assert bool(jnp.all(jnp.isfinite(out)))
    assert jnp.allclose(out, ref, atol=1e-2, rtol=1e-2), \
        "mismatch vs pure-JAX reference"
    print("KERNEL_OK")
</pallas_src>

<mosaic_0001>
module attributes {stable_mosaic.version = 11 : i64} {
  func.func @_encode_proj1_kernel(%arg0: i32, %arg1: i32, %arg2: memref<16x512xbf16, #tpu.memory_space<vmem>>, %arg3: memref<512x128xbf16, #tpu.memory_space<vmem>>, %arg4: memref<1x128xf32, #tpu.memory_space<vmem>>, %arg5: memref<128x128xbf16, #tpu.memory_space<vmem>>, %arg6: memref<1x128xf32, #tpu.memory_space<vmem>>, %arg7: memref<16x128xbf16, #tpu.memory_space<vmem>>, %arg8: memref<1x1x128xf32, #tpu.memory_space<vmem>>, %arg9: memref<1x1x128xf32, #tpu.memory_space<vmem>>, %arg10: memref<16x128xf32, #tpu.memory_space<vmem>>) attributes {dimension_semantics = [#tpu.dimension_semantics<parallel>, #tpu.dimension_semantics<arbitrary>], iteration_bounds = array<i64: 1, 2>, scalar_prefetch = 0 : i64, scratch_operands = 1 : i64, tpu.core_type = #tpu.core_type<tc>, window_params = [{transform_indices = @transform_0, window_bounds = array<i64: 16, 512>}, {transform_indices = @transform_1, window_bounds = array<i64: 512, 128>}, {pipeline_mode = #tpu.pipeline_mode<synchronous>, transform_indices = @transform_2, window_bounds = array<i64: 1, 128>}, {pipeline_mode = #tpu.pipeline_mode<synchronous>, transform_indices = @transform_3, window_bounds = array<i64: 128, 128>}, {pipeline_mode = #tpu.pipeline_mode<synchronous>, transform_indices = @transform_4, window_bounds = array<i64: 1, 128>}, {transform_indices = @transform_5, window_bounds = array<i64: 16, 128>}, {transform_indices = @transform_6, window_bounds = array<i64: 1, 1, 128>}, {transform_indices = @transform_7, window_bounds = array<i64: 1, 1, 128>}]} {
    %c0_i32 = arith.constant 0 : i32
    %0 = arith.cmpi eq, %arg1, %c0_i32 : i32
    %1 = arith.extui %0 : i1 to i32
    %c0_i32_0 = arith.constant 0 : i32
    %2 = arith.cmpi ne, %1, %c0_i32_0 : i32
    scf.if %2 {
      %cst_9 = arith.constant 0.000000e+00 : f32
      %12 = vector.broadcast %cst_9 : f32 to vector<16x128xf32>
      %c0_10 = arith.constant 0 : index
      %c0_11 = arith.constant 0 : index
      %13 = vector.load %arg10[%c0_10, %c0_11] : memref<16x128xf32, #tpu.memory_space<vmem>>, vector<16x128xf32>
      tpu.vector_store %arg10[%c0_10, %c0_11], %12 {strides = array<i32>} : memref<16x128xf32, #tpu.memory_space<vmem>>, vector<16x128xf32>,
    } else {
    }
    %c0 = arith.constant 0 : index
    %c0_1 = arith.constant 0 : index
    %3 = vector.load %arg10[%c0, %c0_1] : memref<16x128xf32, #tpu.memory_space<vmem>>, vector<16x128xf32>
    %c0_2 = arith.constant 0 : index
    %c0_3 = arith.constant 0 : index
    %4 = vector.load %arg2[%c0_2, %c0_3] : memref<16x512xbf16, #tpu.memory_space<vmem>>, vector<16x512xbf16>
    %c0_4 = arith.constant 0 : index
    %c0_5 = arith.constant 0 : index
    %5 = vector.load %arg3[%c0_4, %c0_5] : memref<512x128xbf16, #tpu.memory_space<vmem>>, vector<512x128xbf16>
    %cst = arith.constant dense<0.000000e+00> : vector<16x128xf32>
    %6 = tpu.matmul %4, %5, %cst {dimension_numbers = #tpu.dot_dimension_numbers<[1], [0], [0], [1], [0, 0, 1, 1], [], []>} : vector<16x512xbf16>, vector<512x128xbf16>, vector<16x128xf32> -> vector<16x128xf32>
    %7 = arith.addf %3, %6 : vector<16x128xf32>
    %c0_6 = arith.constant 0 : index
    %c0_7 = arith.constant 0 : index
    %8 = vector.load %arg10[%c0_6, %c0_7] : memref<16x128xf32, #tpu.memory_space<vmem>>, vector<16x128xf32>
    tpu.vector_store %arg10[%c0_6, %c0_7], %7 {strides = array<i32>} : memref<16x128xf32, #tpu.memory_space<vmem>>, vector<16x128xf32>,
    %c1_i32 = arith.constant 1 : i32
    %9 = arith.cmpi eq, %arg1, %c1_i32 : i32
    %10 = arith.extui %9 : i1 to i32
    %c0_i32_8 = arith.constant 0 : i32
    %11 = arith.cmpi ne, %10, %c0_i32_8 : i32
    scf.if %11 {
      %c0_9 = arith.constant 0 : index
      %c0_10 = arith.constant 0 : index
      %12 = vector.load %arg10[%c0_9, %c0_10] : memref<16x128xf32, #tpu.memory_space<vmem>>, vector<16x128xf32>
      %c0_11 = arith.constant 0 : index
      %c0_12 = arith.constant 0 : index
      %13 = vector.load %arg4[%c0_11, %c0_12] : memref<1x128xf32, #tpu.memory_space<vmem>>, vector<1x128xf32>
      %14 = vector.broadcast %13 : vector<1x128xf32> to vector<16x128xf32>
      %15 = arith.addf %12, %14 : vector<16x128xf32>
      %cst_13 = arith.constant 0.000000e+00 : f32
      %16 = vector.broadcast %cst_13 : f32 to vector<16x128xf32>
      %17 = arith.maximumf %15, %16 : vector<16x128xf32>
      %18 = arith.truncf %17 : vector<16x128xf32> to vector<16x128xbf16>
      %c0_14 = arith.constant 0 : index
      %c0_15 = arith.constant 0 : index
      %19 = vector.load %arg5[%c0_14, %c0_15] : memref<128x128xbf16, #tpu.memory_space<vmem>>, vector<128x128xbf16>
      %cst_16 = arith.constant dense<0.000000e+00> : vector<16x128xf32>
      %20 = tpu.matmul %18, %19, %cst_16 {dimension_numbers = #tpu.dot_dimension_numbers<[1], [0], [0], [1], [0, 0, 1, 1], [], []>} : vector<16x128xbf16>, vector<128x128xbf16>, vector<16x128xf32> -> vector<16x128xf32>
      %c0_17 = arith.constant 0 : index
      %c0_18 = arith.constant 0 : index
      %21 = vector.load %arg6[%c0_17, %c0_18] : memref<1x128xf32, #tpu.memory_space<vmem>>, vector<1x128xf32>
      %22 = vector.broadcast %21 : vector<1x128xf32> to vector<16x128xf32>
      %23 = arith.addf %20, %22 : vector<16x128xf32>
      %c16_i32 = arith.constant 16 : i32
      %24 = arith.muli %arg0, %c16_i32 : i32
      %25 = tpu.iota {dimensions = array<i32: 0>} : vector<16x128xi32>
      %26 = vector.broadcast %24 : i32 to vector<16x128xi32>
      %27 = arith.addi %26, %25 : vector<16x128xi32>
      %c2_i32 = arith.constant 2 : i32
      %28 = vector.broadcast %c2_i32 : i32 to vector<16x128xi32>
      %29 = arith.cmpi slt, %27, %28 : vector<16x128xi32>
      %cst_19 = arith.constant 0.000000e+00 : f32
      %30 = vector.broadcast %cst_19 : f32 to vector<16x128xf32>
      %31 = arith.select %29, %23, %30 : vector<16x128xi1>, vector<16x128xf32>
      %cst_20 = arith.constant dense<0.000000e+00> : vector<128xf32>
      %32 = vector.multi_reduction <add>, %31, %cst_20 [0] : vector<16x128xf32> to vector<128xf32>
      %33 = vector.shape_cast %32 : vector<128xf32> to vector<1x128xf32>
      %34 = vector.shape_cast %33 : vector<1x128xf32> to vector<1x1x128xf32>
      %c0_21 = arith.constant 0 : index
      %c0_22 = arith.constant 0 : index
      %c0_23 = arith.constant 0 : index
      %35 = vector.load %arg8[%c0_21, %c0_22, %c0_23] : memref<1x1x128xf32, #tpu.memory_space<vmem>>, vector<1x1x128xf32>
      tpu.vector_store %arg8[%c0_21, %c0_22, %c0_23], %34 {strides = array<i32>} : memref<1x1x128xf32, #tpu.memory_space<vmem>>, vector<1x1x128xf32>,
      %36 = arith.mulf %31, %23 : vector<16x128xf32>
      %cst_24 = arith.constant dense<0.000000e+00> : vector<128xf32>
      %37 = vector.multi_reduction <add>, %36, %cst_24 [0] : vector<16x128xf32> to vector<128xf32>
      %38 = vector.shape_cast %37 : vector<128xf32> to vector<1x128xf32>
      %39 = vector.shape_cast %38 : vector<1x128xf32> to vector<1x1x128xf32>
      %c0_25 = arith.constant 0 : index
      %c0_26 = arith.constant 0 : index
      %c0_27 = arith.constant 0 : index
      %40 = vector.load %arg9[%c0_25, %c0_26, %c0_27] : memref<1x1x128xf32, #tpu.memory_space<vmem>>, vector<1x1x128xf32>
      tpu.vector_store %arg9[%c0_25, %c0_26, %c0_27], %39 {strides = array<i32>} : memref<1x1x128xf32, #tpu.memory_space<vmem>>, vector<1x1x128xf32>,
      %41 = arith.truncf %23 : vector<16x128xf32> to vector<16x128xbf16>
      %c0_28 = arith.constant 0 : index
      %c0_29 = arith.constant 0 : index
      %42 = vector.load %arg7[%c0_28, %c0_29] : memref<16x128xbf16, #tpu.memory_space<vmem>>, vector<16x128xbf16>
      tpu.vector_store %arg7[%c0_28, %c0_29], %41 {strides = array<i32>} : memref<16x128xbf16, #tpu.memory_space<vmem>>, vector<16x128xbf16>,
    } else {
    }
    return
  }
  func.func @transform_0(%arg0: i32, %arg1: i32) -> (i32, i32) {
    %c0_i32 = arith.constant 0 : i32
    return %arg0, %arg1 : i32, i32
  }
  func.func @transform_1(%arg0: i32, %arg1: i32) -> (i32, i32) {
    %c0_i32 = arith.constant 0 : i32
    %c0_i32_0 = arith.constant 0 : i32
    return %arg1, %c0_i32 : i32, i32
  }
  func.func @transform_2(%arg0: i32, %arg1: i32) -> (i32, i32) {
    %c0_i32 = arith.constant 0 : i32
    %c0_i32_0 = arith.constant 0 : i32
    %c0_i32_1 = arith.constant 0 : i32
    return %c0_i32, %c0_i32_0 : i32, i32
  }
  func.func @transform_3(%arg0: i32, %arg1: i32) -> (i32, i32) {
    %c0_i32 = arith.constant 0 : i32
    %c0_i32_0 = arith.constant 0 : i32
    %c0_i32_1 = arith.constant 0 : i32
    return %c0_i32, %c0_i32_0 : i32, i32
  }
  func.func @transform_4(%arg0: i32, %arg1: i32) -> (i32, i32) {
    %c0_i32 = arith.constant 0 : i32
    %c0_i32_0 = arith.constant 0 : i32
    %c0_i32_1 = arith.constant 0 : i32
    return %c0_i32, %c0_i32_0 : i32, i32
  }
  func.func @transform_5(%arg0: i32, %arg1: i32) -> (i32, i32) {
    %c0_i32 = arith.constant 0 : i32
    %c0_i32_0 = arith.constant 0 : i32
    return %arg0, %c0_i32 : i32, i32
  }
  func.func @transform_6(%arg0: i32, %arg1: i32) -> (i32, i32, i32) {
    %c0_i32 = arith.constant 0 : i32
    %c0_i32_0 = arith.constant 0 : i32
    %c0_i32_1 = arith.constant 0 : i32
    return %arg0, %c0_i32, %c0_i32_0 : i32, i32, i32
  }
  func.func @transform_7(%arg0: i32, %arg1: i32) -> (i32, i32, i32) {
    %c0_i32 = arith.constant 0 : i32
    %c0_i32_0 = arith.constant 0 : i32
    %c0_i32_1 = arith.constant 0 : i32
    return %arg0, %c0_i32, %c0_i32_0 : i32, i32, i32
  }
}

</mosaic_0001>

<llo_original>
// kernel: tpu_custom_call.1
$region0: #{tpu_custom_call.1}
  #allocation0 [shape = 'u32[]', space=smem, size = 0x4, offset = 0x4, fixed_abs, tag = 'smem constant byte address 0x4 - core index']
  #allocation1 [shape = 'u32[144,128]{1,0:T(1,128)}', space=vmem, size = 0x12000, scoped, tag = 'internal scratch']
  #allocation2 [shape = 'f32[16,128]{1,0:T(8,128)}', space=vmem, size = 0x2000, scoped, tag = 'scratch operand']
  %s0 = inlined_call_operand.hbm [shape: bf16[16,1024], index: 0, kind: input, shape index: {}]
  %s1 = inlined_call_operand.hbm [shape: bf16[1024,128], index: 1, kind: input, shape index: {}]
  %s2 = inlined_call_operand.vmem [shape: f32[1,128], index: 2, kind: input, shape index: {}]
  %s3 = inlined_call_operand.hbm [shape: bf16[128,128], index: 3, kind: input, shape index: {}]
  %s4 = inlined_call_operand.vmem [shape: f32[1,128], index: 4, kind: input, shape index: {}]
  %s5 = inlined_call_operand.hbm [shape: bf16[16,128], index: 5, kind: output, shape index: {0}]
  %s6 = inlined_call_operand.hbm [shape: f32[1,1,128], index: 6, kind: output, shape index: {1}]
  %s7 = inlined_call_operand.hbm [shape: f32[1,1,128], index: 7, kind: output, shape index: {2}]
  %8 = xla_tuple %s5, %s6, %s7
  %s9 = sld [smem:[#allocation0]]
  $region89: #{tpu_custom_call.1} parent=0
    _
  %s11 = ssub.s32 1, %s9
  %s12 = scalar_select 0, %s11, %s9
  $region1: #{tpu_custom_call.1} parent=0
    #allocation3 [shape = 'u8[32768]{0}', space=vmem, size = 0x8000, scoped, tag = 'input window, operand 0']
    #allocation4 [shape = 's32[2]{0}', space=sflag, size = 0x8, scoped, tag = 'scoped memory for tpu_custom_call.1']
    #allocation5 [shape = 's32[2]{0}', space=sflag, size = 0x8, scoped, tag = 'scoped memory for tpu_custom_call.1']
    #allocation6 [shape = 'u8[262144]{0}', space=vmem, size = 0x40000, scoped, tag = 'input window, operand 1']
    #allocation7 [shape = 's32[2]{0}', space=sflag, size = 0x8, scoped, tag = 'scoped memory for tpu_custom_call.1']
    #allocation8 [shape = 'u8[32768]{0}', space=vmem, size = 0x8000, scoped, tag = 'input window, operand 3, single buffered']
    #allocation9 [shape = 'u8[4096]{0}', space=vmem, size = 0x1000, scoped, tag = 'output window, operand 0, single buffered']
    #allocation10 [shape = 'u8[512]{0}', space=vmem, size = 0x400, scoped, tag = 'output window, operand 1, single buffered']
    #allocation11 [shape = 's32[1]{0}', space=sflag, size = 0x4, scoped, tag = 'scoped memory for tpu_custom_call.1']
    #allocation12 [shape = 'u8[512]{0}', space=vmem, size = 0x400, scoped, tag = 'output window, operand 2, single buffered']
    %13 = vsyncpa [#allocation4], 0
    %s14 = scalar_lea.sflag [#allocation4], 1
    %15 = vsyncpa %s14, 0
    %16 = vsyncpa [#allocation7], 0
    %s17 = scalar_lea.sflag [#allocation7], 1
    %18 = vsyncpa %s17, 0
    %19 = vsyncpa [#allocation5], 0
    %20 = vsyncpa [#allocation11], 0
    loop: start=0, step=1, limit=4
    $region2: #{tpu_custom_call.1} parent=1 // loop_pre_header
      _
    $region3: #{tpu_custom_call.1} parent=1 // loop_header
      %s22 = sphi 0, %s26
      %p23 = scmp.ge.s32.totalorder %s22, 4
      %s29 = sphi 0, %s41
      %s30 = sphi 0, %s37
      %s31 = sphi 0, %s29
      %s32 = sphi 0, %s30
      %s33 = sphi 0, %s31
      %s34 = sphi 0, %s32
      %s46 = sphi 0, %s48
      %s49 = sphi 0, %s46
      %s50 = sphi 0, %s49
      %s66 = sphi 0, %s50
      %s72 = sphi 0, %s74
      %s75 = sphi 0, %s72
      %s76 = sphi 0, %s75
      %s92 = sphi 0, %s76
      %s96 = sphi 0, %s96
      %s98 = sphi 0, %s96
      %s99 = sphi 0, %s98
      %s113 = sphi 0, %s99
      %s117 = sphi 0, %s117
      %s119 = sphi 0, %s117
      %s120 = sphi 0, %s119
      %s134 = sphi 0, %s120
      %s138 = sphi 0, %s138
      %s140 = sphi 0, %s138
      %s141 = sphi 0, %s140
      %s155 = sphi 0, %s141
      %s161 = sphi 0, %s163
      %s164 = sphi 0, %s161
      %s165 = sphi 0, %s164
      %s181 = sphi 0, %s165
      %s187 = sphi 0, %s189
      %s190 = sphi 0, %s187
      %s191 = sphi 0, %s190
      %s207 = sphi 0, %s191
      %s213 = sphi 0, %s215
      %s216 = sphi 0, %s213
      %s217 = sphi 0, %s216
      %s233 = sphi 0, %s217
    $region4: #{tpu_custom_call.1} parent=1 // loop_header_branch
      %25 = sbr.rel (%p23) target = $region8
    $region5: #{tpu_custom_call.1} parent=1 // loop_body
      %s27 = ssub.s32 %s22, 1
      %s28 = ssub.s32 %s22, 2
      %s35 = sadd.s32 1, %s30
      %p36 = scmp.ge.s32.totalorder %s35, 2
      %s37 = scalar_select %p36, 0, %s35
      %s38 = sadd.s32 1, %s29
      %s39 = scalar_select %p36, %s38, %s29
      %p40 = scmp.ge.s32.totalorder %s39, 1
      %s41 = scalar_select %p40, 0, %s39
      %s42 = ssub.s32 %s29, %s41
      %s43 = ssub.s32 %s30, %s37
      %s44 = sor.u32 %s42, %s43
      %p45 = scmp.eq.s32.totalorder %s44, 0
      %s47 = sadd.s32 %s46, 1
      %s48 = scalar_select %p45, %s46, %s47
      %p51 = pneg %p45
      %p52 = scmp.eq.s32.totalorder %s22, 1
      %p53 = por %p51, %p52
      %p54 = scmp.ne.s32.totalorder %s46, %s49
      %p55 = scmp.eq.s32.totalorder %s22, 0
      %p56 = por %p54, %p55
      %p57 = scmp.ne.s32.totalorder %s46, %s49
      %p58 = scmp.eq.s32.totalorder %s27, 1
      %p59 = por %p57, %p58
      %p60 = scmp.ne.s32.totalorder %s49, %s50
      %p61 = scmp.eq.s32.totalorder %s27, 0
      %p62 = por %p60, %p61
      %p63 = scmp.ne.s32.totalorder %s49, %s50
      %p64 = scmp.eq.s32.totalorder %s28, 1
      %p65 = por %p63, %p64
      %p67 = scmp.ne.s32.totalorder %s50, %s66
      %p68 = scmp.eq.s32.totalorder %s28, 0
      %p69 = por %p67, %p68
      %s70 = ssub.s32 %s30, %s37
      %p71 = scmp.eq.s32.totalorder %s70, 0
      %s73 = sadd.s32 %s72, 1
      %s74 = scalar_select %p71, %s72, %s73
      %p77 = pneg %p71
      %p78 = scmp.eq.s32.totalorder %s22, 1
      %p79 = por %p77, %p78
      %p80 = scmp.ne.s32.totalorder %s72, %s75
      %p81 = scmp.eq.s32.totalorder %s22, 0
      %p82 = por %p80, %p81
      %p83 = scmp.ne.s32.totalorder %s72, %s75
      %p84 = scmp.eq.s32.totalorder %s27, 1
      %p85 = por %p83, %p84
      %p86 = scmp.ne.s32.totalorder %s75, %s76
      %p87 = scmp.eq.s32.totalorder %s27, 0
      %p88 = por %p86, %p87
      %p89 = scmp.ne.s32.totalorder %s75, %s76
      %p90 = scmp.eq.s32.totalorder %s28, 1
      %p91 = por %p89, %p90
      %p93 = scmp.ne.s32.totalorder %s76, %s92
      %p94 = scmp.eq.s32.totalorder %s28, 0
      %p95 = por %p93, %p94
      %s97 = sadd.s32 %s96, 1
      %p100 = scmp.eq.s32.totalorder %s22, 1
      %p101 = scmp.ne.s32.totalorder %s96, %s98
      %p102 = scmp.eq.s32.totalorder %s22, 0
      %p103 = por %p101, %p102
      %p104 = scmp.ne.s32.totalorder %s96, %s98
      %p105 = scmp.eq.s32.totalorder %s27, 1
      %p106 = por %p104, %p105
      %p107 = scmp.ne.s32.totalorder %s98, %s99
      %p108 = scmp.eq.s32.totalorder %s27, 0
      %p109 = por %p107, %p108
      %p110 = scmp.ne.s32.totalorder %s98, %s99
      %p111 = scmp.eq.s32.totalorder %s28, 1
      %p112 = por %p110, %p111
      %p114 = scmp.ne.s32.totalorder %s99, %s113
      %p115 = scmp.eq.s32.totalorder %s28, 0
      %p116 = por %p114, %p115
      %s118 = sadd.s32 %s117, 1
      %p121 = scmp.eq.s32.totalorder %s22, 1
      %p122 = scmp.ne.s32.totalorder %s117, %s119
      %p123 = scmp.eq.s32.totalorder %s22, 0
      %p124 = por %p122, %p123
      %p125 = scmp.ne.s32.totalorder %s117, %s119
      %p126 = scmp.eq.s32.totalorder %s27, 1
      %p127 = por %p125, %p126
      %p128 = scmp.ne.s32.totalorder %s119, %s120
      %p129 = scmp.eq.s32.totalorder %s27, 0
      %p130 = por %p128, %p129
      %p131 = scmp.ne.s32.totalorder %s119, %s120
      %p132 = scmp.eq.s32.totalorder %s28, 1
      %p133 = por %p131, %p132
      %p135 = scmp.ne.s32.totalorder %s120, %s134
      %p136 = scmp.eq.s32.totalorder %s28, 0
      %p137 = por %p135, %p136
      %s139 = sadd.s32 %s138, 1
      %p142 = scmp.eq.s32.totalorder %s22, 1
      %p143 = scmp.ne.s32.totalorder %s138, %s140
      %p144 = scmp.eq.s32.totalorder %s22, 0
      %p145 = por %p143, %p144
      %p146 = scmp.ne.s32.totalorder %s138, %s140
      %p147 = scmp.eq.s32.totalorder %s27, 1
      %p148 = por %p146, %p147
      %p149 = scmp.ne.s32.totalorder %s140, %s141
      %p150 = scmp.eq.s32.totalorder %s27, 0
      %p151 = por %p149, %p150
      %p152 = scmp.ne.s32.totalorder %s140, %s141
      %p153 = scmp.eq.s32.totalorder %s28, 1
      %p154 = por %p152, %p153
      %p156 = scmp.ne.s32.totalorder %s141, %s155
      %p157 = scmp.eq.s32.totalorder %s28, 0
      %p158 = por %p156, %p157
      %s159 = ssub.s32 %s29, %s41
      %p160 = scmp.eq.s32.totalorder %s159, 0
      %s162 = sadd.s32 %s161, 1
      %s163 = scalar_select %p160, %s161, %s162
      %p166 = pneg %p160
      %p167 = scmp.eq.s32.totalorder %s22, 1
      %p168 = por %p166, %p167
      %p169 = scmp.ne.s32.totalorder %s161, %s164
      %p170 = scmp.eq.s32.totalorder %s22, 0
      %p171 = por %p169, %p170
      %p172 = scmp.ne.s32.totalorder %s161, %s164
      %p173 = scmp.eq.s32.totalorder %s27, 1
      %p174 = por %p172, %p173
      %p175 = scmp.ne.s32.totalorder %s164, %s165
      %p176 = scmp.eq.s32.totalorder %s27, 0
      %p177 = por %p175, %p176
      %p178 = scmp.ne.s32.totalorder %s164, %s165
      %p179 = scmp.eq.s32.totalorder %s28, 1
      %p180 = por %p178, %p179
      %p182 = scmp.ne.s32.totalorder %s165, %s181
      %p183 = scmp.eq.s32.totalorder %s28, 0
      %p184 = por %p182, %p183
      %s185 = ssub.s32 %s29, %s41
      %p186 = scmp.eq.s32.totalorder %s185, 0
      %s188 = sadd.s32 %s187, 1
      %s189 = scalar_select %p186, %s187, %s188
      %p192 = pneg %p186
      %p193 = scmp.eq.s32.totalorder %s22, 1
      %p194 = por %p192, %p193
      %p195 = scmp.ne.s32.totalorder %s187, %s190
      %p196 = scmp.eq.s32.totalorder %s22, 0
      %p197 = por %p195, %p196
      %p198 = scmp.ne.s32.totalorder %s187, %s190
      %p199 = scmp.eq.s32.totalorder %s27, 1
      %p200 = por %p198, %p199
      %p201 = scmp.ne.s32.totalorder %s190, %s191
      %p202 = scmp.eq.s32.totalorder %s27, 0
      %p203 = por %p201, %p202
      %p204 = scmp.ne.s32.totalorder %s190, %s191
      %p205 = scmp.eq.s32.totalorder %s28, 1
      %p206 = por %p204, %p205
      %p208 = scmp.ne.s32.totalorder %s191, %s207
      %p209 = scmp.eq.s32.totalorder %s28, 0
      %p210 = por %p208, %p209
      %s211 = ssub.s32 %s29, %s41
      %p212 = scmp.eq.s32.totalorder %s211, 0
      %s214 = sadd.s32 %s213, 1
      %s215 = scalar_select %p212, %s213, %s214
      %p218 = pneg %p212
      %p219 = scmp.eq.s32.totalorder %s22, 1
      %p220 = por %p218, %p219
      %p221 = scmp.ne.s32.totalorder %s213, %s216
      %p222 = scmp.eq.s32.totalorder %s22, 0
      %p223 = por %p221, %p222
      %p224 = scmp.ne.s32.totalorder %s213, %s216
      %p225 = scmp.eq.s32.totalorder %s27, 1
      %p226 = por %p224, %p225
      %p227 = scmp.ne.s32.totalorder %s216, %s217
      %p228 = scmp.eq.s32.totalorder %s27, 0
      %p229 = por %p227, %p228
      %p230 = scmp.ne.s32.totalorder %s216, %s217
      %p231 = scmp.eq.s32.totalorder %s28, 1
      %p232 = por %p230, %p231
      %p234 = scmp.ne.s32.totalorder %s217, %s233
      %p235 = scmp.eq.s32.totalorder %s28, 0
      %p236 = por %p234, %p235
      %p237 = scmp.le.s32.totalorder 1, %s22
      %p238 = scmp.lt.s32.totalorder %s22, 3
      %p239 = pnand %p237, %p238
      %p240 = pneg %p239
      // Predicated region
      $region9: #{tpu_custom_call.1} parent=5 // pred_check
        _
      $region10: #{tpu_custom_call.1} parent=5 // pred_check_branch
        %242 = sbr.rel (%p239) target = $region12
      $region11: #{tpu_custom_call.1} parent=5 // pred_region
        %s243 = ssub.s32 %s22, 1
        // Predicated region
        $region13: #{tpu_custom_call.1} parent=11 // pred_check
          %p244 = pneg %p109
        $region14: #{tpu_custom_call.1} parent=11 // pred_check_branch
          %246 = sbr.rel (%p244) target = $region16
        $region15: #{tpu_custom_call.1} parent=11 // pred_region
          _
        $region16: #{tpu_custom_call.1} parent=11 // pred_fallthru
          _
        // Predicated region
        $region17: #{tpu_custom_call.1} parent=11 // pred_check
          %p247 = pneg %p130
        $region18: #{tpu_custom_call.1} parent=11 // pred_check_branch
          %249 = sbr.rel (%p247) target = $region20
        $region19: #{tpu_custom_call.1} parent=11 // pred_region
          %s251 = ssub.s32 1024, 1024
          %252 = vsyncadd [#allocation7], %s251
          %s253 = sshll.u32 [#allocation8], 4
          %s254 = int_to_ptr.vmem [resolvable:$true] %s253
          %259 = dma.hbm_to_vmem [thread:$0]  %s3, 1024, %s254, [#allocation7], 64, 64, 4
        $region20: #{tpu_custom_call.1} parent=11 // pred_fallthru
          _
        // Predicated region
        $region21: #{tpu_custom_call.1} parent=11 // pred_check
          %p260 = pneg %p151
        $region22: #{tpu_custom_call.1} parent=11 // pred_check_branch
          %262 = sbr.rel (%p260) target = $region24
        $region23: #{tpu_custom_call.1} parent=11 // pred_region
          _
        $region24: #{tpu_custom_call.1} parent=11 // pred_fallthru
          _
      $region12: #{tpu_custom_call.1} parent=5 // pred_fallthru
        _
      %p263 = scmp.lt.s32.totalorder %s22, 2
      // Predicated region
      $region25: #{tpu_custom_call.1} parent=5 // pred_check
        %p264 = pneg %p263
      $region26: #{tpu_custom_call.1} parent=5 // pred_check_branch
        %266 = sbr.rel (%p264) target = $region28
      $region27: #{tpu_custom_call.1} parent=5 // pred_region
        // Predicated region
        $region29: #{tpu_custom_call.1} parent=27 // pred_check
          %p267 = pneg %p56
        $region30: #{tpu_custom_call.1} parent=27 // pred_check_branch
          %269 = sbr.rel (%p267) target = $region32
        $region31: #{tpu_custom_call.1} parent=27 // pred_region
          %s270 = sand.u32 %s46, 1
          %s271 = scalar_lea.sflag [#allocation4], %s270
          %s272 = sand.u32 %s46, 1
          %s273 = smul.addr %s272, 32
          %s274 = scalar_lea.vmem [#allocation3], %s273
          %s275 = smul.u32 2, %s29
          %s276 = smul.u32 4, %s30
          %s278 = ssub.s32 512, 512
          %279 = vsyncadd %s271, %s278
          %s280 = smul.addr %s275, 8
          %s281 = sadd.s32 %s276, %s280
          %s282 = smul.addr %s281, 64
          %s283 = scalar_lea.hbm %s0, %s282
          %s284 = sshll.u32 %s274, 4
          %s285 = int_to_ptr.vmem [resolvable:$true] %s284
          %290 = dma.hbm_to_vmem [thread:$0]  %s283, 512, %s285, %s271, 512, 256, 16
        $region32: #{tpu_custom_call.1} parent=27 // pred_fallthru
          _
        // Predicated region
        $region33: #{tpu_custom_call.1} parent=27 // pred_check
          %p291 = pneg %p82
        $region34: #{tpu_custom_call.1} parent=27 // pred_check_branch
          %293 = sbr.rel (%p291) target = $region36
        $region35: #{tpu_custom_call.1} parent=27 // pred_region
          %s294 = sand.u32 %s22, 1
          %s295 = scalar_lea.sflag [#allocation7], %s294
          %s296 = sand.u32 %s72, 1
          %s297 = smul.addr %s296, 256
          %s298 = scalar_lea.vmem [#allocation6], %s297
          %s299 = smul.u32 64, %s30
          %s301 = ssub.s32 4096, 4096
          %302 = vsyncadd %s295, %s301
          %s303 = smul.addr %s299, 64
          %s304 = scalar_lea.hbm %s1, %s303
          %s305 = sshll.u32 %s298, 4
          %s306 = int_to_ptr.vmem [resolvable:$true] %s305
          %311 = dma.hbm_to_vmem [thread:$0]  %s304, 4096, %s306, %s295, 64, 64, 4
        $region36: #{tpu_custom_call.1} parent=27 // pred_fallthru
          _
      $region28: #{tpu_custom_call.1} parent=5 // pred_fallthru
        _
      %p312 = scmp.le.s32.totalorder 1, %s22
      %p313 = scmp.lt.s32.totalorder %s22, 3
      %p314 = pnand %p312, %p313
      %p315 = pneg %p314
      // Predicated region
      $region37: #{tpu_custom_call.1} parent=5 // pred_check
        _
      $region38: #{tpu_custom_call.1} parent=5 // pred_check_branch
        %317 = sbr.rel (%p314) target = $region40
      $region39: #{tpu_custom_call.1} parent=5 // pred_region
        %s318 = ssub.s32 %s22, 1
        %s319 = sand.u32 %s49, 1
        %s320 = scalar_lea.sflag [#allocation4], %s319
        %s321 = sand.u32 %s49, 1
        %s322 = smul.addr %s321, 32
        %s323 = scalar_lea.vmem [#allocation3], %s322
        // Predicated region
        $region41: #{tpu_custom_call.1} parent=39 // pred_check
          %p324 = pneg %p62
        $region42: #{tpu_custom_call.1} parent=39 // pred_check_branch
          %326 = sbr.rel (%p324) target = $region44
        $region43: #{tpu_custom_call.1} parent=39 // pred_region
          %327 = dma.done %s320, 512
        $region44: #{tpu_custom_call.1} parent=39 // pred_fallthru
          _
        %s328 = sand.u32 %s27, 1
        %s329 = scalar_lea.sflag [#allocation7], %s328
        %s330 = sand.u32 %s75, 1
        %s331 = smul.addr %s330, 256
        %s332 = scalar_lea.vmem [#allocation6], %s331
        // Predicated region
        $region45: #{tpu_custom_call.1} parent=39 // pred_check
          %p333 = pneg %p88
        $region46: #{tpu_custom_call.1} parent=39 // pred_check_branch
          %335 = sbr.rel (%p333) target = $region48
        $region47: #{tpu_custom_call.1} parent=39 // pred_region
          %336 = dma.done %s329, 4096
        $region48: #{tpu_custom_call.1} parent=39 // pred_fallthru
          _
        // Predicated region
        $region49: #{tpu_custom_call.1} parent=39 // pred_check
          %p337 = pneg %p130
        $region50: #{tpu_custom_call.1} parent=39 // pred_check_branch
          %339 = sbr.rel (%p337) target = $region52
        $region51: #{tpu_custom_call.1} parent=39 // pred_region
          %340 = dma.done [#allocation7], 1024
        $region52: #{tpu_custom_call.1} parent=39 // pred_fallthru
          _
        %s341 = sand.u32 %s49, 1
        %s342 = scalar_lea.sflag [#allocation4], %s341
        %s343 = sand.u32 %s49, 1
        %s344 = smul.addr %s343, 32
        %s345 = scalar_lea.vmem [#allocation3], %s344
        %p346 = pneg %p62
        %p347 = pneg %p59
        %s348 = sand.u32 %s27, 1
        %s349 = scalar_lea.sflag [#allocation7], %s348
        %s350 = sand.u32 %s75, 1
        %s351 = smul.addr %s350, 256
        %s352 = scalar_lea.vmem [#allocation6], %s351
        %p353 = pneg %p88
        %p354 = pneg %p85
        %p355 = pneg %p109
        %p356 = pneg %p106
        %p357 = pneg %p130
        %p358 = pneg %p127
        %p359 = pneg %p151
        %p360 = pneg %p148
        %p361 = pneg %p177
        %p362 = pneg %p174
        %p363 = pneg %p203
        %p364 = pneg %p200
        %p365 = pneg %p229
        %p366 = pneg %p226
        %s367 = smul.u32 2, %s31
        %s368 = smul.u32 4, %s32
        %s369 = smul.u32 64, %s32
        %s370 = smul.u32 2, %s31
        %p372 = scmp.eq.s32.totalorder %s32, 0
        // Predicated region
        $region53: #{tpu_custom_call.1} parent=39 // pred_check
          %p373 = pneg %p372
        $region54: #{tpu_custom_call.1} parent=39 // pred_check_branch
          %375 = sbr.rel (%p373) target = $region56
        $region55: #{tpu_custom_call.1} parent=39 // pred_region
          %376 = vst [vmem:[#allocation2] sm:$0xff] 0.0
          %377 = vst [vmem:[#allocation2 + $0x8] sm:$0xff] 0.0
        $region56: #{tpu_custom_call.1} parent=39 // pred_fallthru
          _
        %v378 = vld [vmem:[#allocation2] sm:$0xff]
        %v379 = vld [vmem:[#allocation2 + $0x8] sm:$0xff]
        %v380 = vld [vmem:[%s323] sm:$0xff]
        %v381 = vld [vmem:[%s323 + $0x8] sm:$0xff]
        %v382 = vld [vmem:[%s323 + $0x10] sm:$0xff]
        %v383 = vld [vmem:[%s323 + $0x18] sm:$0xff]
        %v384 = vld [vmem:[%s332] sm:$0xf]
        %v385 = vld [vmem:[%s332 + $0x4] sm:$0xf]
        %v386 = vld [vmem:[%s332 + $0x8] sm:$0xf]
        %v387 = vld [vmem:[%s332 + $0xc] sm:$0xf]
        %v388 = vld [vmem:[%s332 + $0x10] sm:$0xf]
        %v389 = vld [vmem:[%s332 + $0x14] sm:$0xf]
        %v390 = vld [vmem:[%s332 + $0x18] sm:$0xf]
        %v391 = vld [vmem:[%s332 + $0x1c] sm:$0xf]
        %v392 = vld [vmem:[%s332 + $0x20] sm:$0xf]
        %v393 = vld [vmem:[%s332 + $0x24] sm:$0xf]
        %v394 = vld [vmem:[%s332 + $0x28] sm:$0xf]
        %v395 = vld [vmem:[%s332 + $0x2c] sm:$0xf]
        %v396 = vld [vmem:[%s332 + $0x30] sm:$0xf]
        %v397 = vld [vmem:[%s332 + $0x34] sm:$0xf]
        %v398 = vld [vmem:[%s332 + $0x38] sm:$0xf]
        %v399 = vld [vmem:[%s332 + $0x3c] sm:$0xf]
        %v400 = vld [vmem:[%s332 + $0x40] sm:$0xf]
        %v401 = vld [vmem:[%s332 + $0x44] sm:$0xf]
        %v402 = vld [vmem:[%s332 + $0x48] sm:$0xf]
        %v403 = vld [vmem:[%s332 + $0x4c] sm:$0xf]
        %v404 = vld [vmem:[%s332 + $0x50] sm:$0xf]
        %v405 = vld [vmem:[%s332 + $0x54] sm:$0xf]
        %v406 = vld [vmem:[%s332 + $0x58] sm:$0xf]
        %v407 = vld [vmem:[%s332 + $0x5c] sm:$0xf]
        %v408 = vld [vmem:[%s332 + $0x60] sm:$0xf]
        %v409 = vld [vmem:[%s332 + $0x64] sm:$0xf]
        %v410 = vld [vmem:[%s332 + $0x68] sm:$0xf]
        %v411 = vld [vmem:[%s332 + $0x6c] sm:$0xf]
        %v412 = vld [vmem:[%s332 + $0x70] sm:$0xf]
        %v413 = vld [vmem:[%s332 + $0x74] sm:$0xf]
        %v414 = vld [vmem:[%s332 + $0x78] sm:$0xf]
        %v415 = vld [vmem:[%s332 + $0x7c] sm:$0xf]
        %v416 = vld [vmem:[%s332 + $0x80] sm:$0xf]
        %v417 = vld [vmem:[%s332 + $0x84] sm:$0xf]
        %v418 = vld [vmem:[%s332 + $0x88] sm:$0xf]
        %v419 = vld [vmem:[%s332 + $0x8c] sm:$0xf]
        %v420 = vld [vmem:[%s332 + $0x90] sm:$0xf]
        %v421 = vld [vmem:[%s332 + $0x94] sm:$0xf]
        %v422 = vld [vmem:[%s332 + $0x98] sm:$0xf]
        %v423 = vld [vmem:[%s332 + $0x9c] sm:$0xf]
        %v424 = vld [vmem:[%s332 + $0xa0] sm:$0xf]
        %v425 = vld [vmem:[%s332 + $0xa4] sm:$0xf]
        %v426 = vld [vmem:[%s332 + $0xa8] sm:$0xf]
        %v427 = vld [vmem:[%s332 + $0xac] sm:$0xf]
        %v428 = vld [vmem:[%s332 + $0xb0] sm:$0xf]
        %v429 = vld [vmem:[%s332 + $0xb4] sm:$0xf]
        %v430 = vld [vmem:[%s332 + $0xb8] sm:$0xf]
        %v431 = vld [vmem:[%s332 + $0xbc] sm:$0xf]
        %v432 = vld [vmem:[%s332 + $0xc0] sm:$0xf]
        %v433 = vld [vmem:[%s332 + $0xc4] sm:$0xf]
        %v434 = vld [vmem:[%s332 + $0xc8] sm:$0xf]
        %v435 = vld [vmem:[%s332 + $0xcc] sm:$0xf]
        %v436 = vld [vmem:[%s332 + $0xd0] sm:$0xf]
        %v437 = vld [vmem:[%s332 + $0xd4] sm:$0xf]
        %v438 = vld [vmem:[%s332 + $0xd8] sm:$0xf]
        %v439 = vld [vmem:[%s332 + $0xdc] sm:$0xf]
        %v440 = vld [vmem:[%s332 + $0xe0] sm:$0xf]
        %v441 = vld [vmem:[%s332 + $0xe4] sm:$0xf]
        %v442 = vld [vmem:[%s332 + $0xe8] sm:$0xf]
        %v443 = vld [vmem:[%s332 + $0xec] sm:$0xf]
        %v444 = vld [vmem:[%s332 + $0xf0] sm:$0xf]
        %v445 = vld [vmem:[%s332 + $0xf4] sm:$0xf]
        %v446 = vld [vmem:[%s332 + $0xf8] sm:$0xf]
        %v447 = vld [vmem:[%s332 + $0xfc] sm:$0xf]
        %v452 = vunpack.c.l.b16 %v380
        %v453 = vunpack.c.h.b16 %v380
        %v454 = vunpack.c.l.b16 %v381
        %v455 = vunpack.c.h.b16 %v381
        %v456 = vunpack.c.l.b16 %v382
        %v457 = vunpack.c.h.b16 %v382
        %v458 = vunpack.c.l.b16 %v383
        %v459 = vunpack.c.h.b16 %v383
        %v460 = vpack.c.b16 %v456, %v452
        %v461 = vpack.c.b16 %v457, %v453
        %v462 = vpack.c.b16 %v458, %v454
        %v463 = vpack.c.b16 %v459, %v455
        %v532 = vunpack.c.l.b16 %v384
        %v533 = vunpack.c.l.b16 %v385
        %v534 = vunpack.c.l.b16 %v386
        %v535 = vunpack.c.l.b16 %v387
        %v536 = vunpack.c.l.b16 %v388
        %v537 = vunpack.c.l.b16 %v389
        %v538 = vunpack.c.l.b16 %v390
        %v539 = vunpack.c.l.b16 %v391
        %v540 = vunpack.c.l.b16 %v392
        %v541 = vunpack.c.l.b16 %v393
        %v542 = vunpack.c.l.b16 %v394
        %v543 = vunpack.c.l.b16 %v395
        %v544 = vunpack.c.l.b16 %v396
        %v545 = vunpack.c.l.b16 %v397
        %v546 = vunpack.c.l.b16 %v398
        %v547 = vunpack.c.l.b16 %v399
        %v548 = vunpack.c.l.b16 %v400
        %v549 = vunpack.c.l.b16 %v401
        %v550 = vunpack.c.l.b16 %v402
        %v551 = vunpack.c.l.b16 %v403
        %v552 = vunpack.c.l.b16 %v404
        %v553 = vunpack.c.l.b16 %v405
        %v554 = vunpack.c.l.b16 %v406
        %v555 = vunpack.c.l.b16 %v407
        %v556 = vunpack.c.l.b16 %v408
        %v557 = vunpack.c.l.b16 %v409
        %v558 = vunpack.c.l.b16 %v410
        %v559 = vunpack.c.l.b16 %v411
        %v560 = vunpack.c.l.b16 %v412
        %v561 = vunpack.c.l.b16 %v413
        %v562 = vunpack.c.l.b16 %v414
        %v563 = vunpack.c.l.b16 %v415
        %v564 = vunpack.c.l.b16 %v416
        %v565 = vunpack.c.l.b16 %v417
        %v566 = vunpack.c.l.b16 %v418
        %v567 = vunpack.c.l.b16 %v419
        %v568 = vunpack.c.l.b16 %v420
        %v569 = vunpack.c.l.b16 %v421
        %v570 = vunpack.c.l.b16 %v422
        %v571 = vunpack.c.l.b16 %v423
        %v572 = vunpack.c.l.b16 %v424
        %v573 = vunpack.c.l.b16 %v425
        %v574 = vunpack.c.l.b16 %v426
        %v575 = vunpack.c.l.b16 %v427
        %v576 = vunpack.c.l.b16 %v428
        %v577 = vunpack.c.l.b16 %v429
        %v578 = vunpack.c.l.b16 %v430
        %v579 = vunpack.c.l.b16 %v431
        %v580 = vunpack.c.l.b16 %v432
        %v581 = vunpack.c.l.b16 %v433
        %v582 = vunpack.c.l.b16 %v434
        %v583 = vunpack.c.l.b16 %v435
        %v584 = vunpack.c.l.b16 %v436
        %v585 = vunpack.c.l.b16 %v437
        %v586 = vunpack.c.l.b16 %v438
        %v587 = vunpack.c.l.b16 %v439
        %v588 = vunpack.c.l.b16 %v440
        %v589 = vunpack.c.l.b16 %v441
        %v590 = vunpack.c.l.b16 %v442
        %v591 = vunpack.c.l.b16 %v443
        %v592 = vunpack.c.l.b16 %v444
        %v593 = vunpack.c.l.b16 %v445
        %v594 = vunpack.c.l.b16 %v446
        %v595 = vunpack.c.l.b16 %v447
        %v596 = vpack.c.b16 %v533, %v532
        %v597 = vpack.c.b16 %v535, %v534
        %v598 = vpack.c.b16 %v537, %v536
        %v599 = vpack.c.b16 %v539, %v538
        %v600 = vpack.c.b16 %v541, %v540
        %v601 = vpack.c.b16 %v543, %v542
        %v602 = vpack.c.b16 %v545, %v544
        %v603 = vpack.c.b16 %v547, %v546
        %v604 = vpack.c.b16 %v549, %v548
        %v605 = vpack.c.b16 %v551, %v550
        %v606 = vpack.c.b16 %v553, %v552
        %v607 = vpack.c.b16 %v555, %v554
        %v608 = vpack.c.b16 %v557, %v556
        %v609 = vpack.c.b16 %v559, %v558
        %v610 = vpack.c.b16 %v561, %v560
        %v611 = vpack.c.b16 %v563, %v562
        %v612 = vpack.c.b16 %v565, %v564
        %v613 = vpack.c.b16 %v567, %v566
        %v614 = vpack.c.b16 %v569, %v568
        %v615 = vpack.c.b16 %v571, %v570
        %v616 = vpack.c.b16 %v573, %v572
        %v617 = vpack.c.b16 %v575, %v574
        %v618 = vpack.c.b16 %v577, %v576
        %v619 = vpack.c.b16 %v579, %v578
        %v620 = vpack.c.b16 %v581, %v580
        %v621 = vpack.c.b16 %v583, %v582
        %v622 = vpack.c.b16 %v585, %v584
        %v623 = vpack.c.b16 %v587, %v586
        %v624 = vpack.c.b16 %v589, %v588
        %v625 = vpack.c.b16 %v591, %v590
        %v626 = vpack.c.b16 %v593, %v592
        %v627 = vpack.c.b16 %v595, %v594
        %660 = vmatprep.subr.bf16.mxu0 0
        %661 = vmatpush1.bf16.msra.mxu0 %v603
        %662 = vmatprep.subr.bf16.mxu0 0
        %663 = vmatpush1.bf16.msra.mxu0 %v602
        %664 = vmatprep.subr.bf16.mxu0 0
        %665 = vmatpush1.bf16.msra.mxu0 %v601
        %666 = vmatprep.subr.bf16.mxu0 0
        %667 = vmatpush1.bf16.msra.mxu0 %v600
        %668 = vmatprep.subr.bf16.mxu0 0
        %669 = vmatpush1.bf16.msra.mxu0 %v599
        %670 = vmatprep.subr.bf16.mxu0 0
        %671 = vmatpush1.bf16.msra.mxu0 %v598
        %672 = vmatprep.subr.bf16.mxu0 0
        %673 = vmatpush1.bf16.msra.mxu0 %v597
        %674 = vmatprep.subr.bf16.mxu0 0
        %675 = vmatpush1.bf16.msra.mxu0 %v596
        %676 = vmatprep.subr.bf16.mxu0 0
        %677 = vmatpush2.bf16.msra.mxu0 %v611
        %678 = vmatprep.subr.bf16.mxu0 0
        %679 = vmatpush2.bf16.msra.mxu0 %v610
        %680 = vmatprep.subr.bf16.mxu0 0
        %681 = vmatpush2.bf16.msra.mxu0 %v609
        %682 = vmatprep.subr.bf16.mxu0 0
        %683 = vmatpush2.bf16.msra.mxu0 %v608
        %684 = vmatprep.subr.bf16.mxu0 0
        %685 = vmatpush2.bf16.msra.mxu0 %v607
        %686 = vmatprep.subr.bf16.mxu0 0
        %687 = vmatpush2.bf16.msra.mxu0 %v606
        %688 = vmatprep.subr.bf16.mxu0 0
        %689 = vmatpush2.bf16.msra.mxu0 %v605
        %690 = vmatprep.subr.bf16.mxu0 0
        %691 = vmatpush2.bf16.msra.mxu0 %v604
        %692 = vmatprep.mubr.bf16.mxu0 %v461
        %693 = vmatmul.mubr.bf16.gmra.mxu0 %v460
        %v694 = vpop.f32.mrf.mxu0
        %v695 = vadd.f32 0.0, %v694
        %v696 = vpop.f32.mrf.mxu0
        %v697 = vpop.f32.mrf.mxu0
        %v698 = vadd.f32 0.0, %v697
        %v699 = vpop.f32.mrf.mxu0
        %700 = vdwg.mxu0
        %701 = vmatprep.subr.bf16.mxu0 0
        %702 = vmatpush1.bf16.msra.mxu0 %v619
        %703 = vmatprep.subr.bf16.mxu0 0
        %704 = vmatpush1.bf16.msra.mxu0 %v618
        %705 = vmatprep.subr.bf16.mxu0 0
        %706 = vmatpush1.bf16.msra.mxu0 %v617
        %707 = vmatprep.subr.bf16.mxu0 0
        %708 = vmatpush1.bf16.msra.mxu0 %v616
        %709 = vmatprep.subr.bf16.mxu0 0
        %710 = vmatpush1.bf16.msra.mxu0 %v615
        %711 = vmatprep.subr.bf16.mxu0 0
        %712 = vmatpush1.bf16.msra.mxu0 %v614
        %713 = vmatprep.subr.bf16.mxu0 0
        %714 = vmatpush1.bf16.msra.mxu0 %v613
        %715 = vmatprep.subr.bf16.mxu0 0
        %716 = vmatpush1.bf16.msra.mxu0 %v612
        %717 = vmatprep.subr.bf16.mxu0 0
        %718 = vmatpush2.bf16.msra.mxu0 %v627
        %719 = vmatprep.subr.bf16.mxu0 0
        %720 = vmatpush2.bf16.msra.mxu0 %v626
        %721 = vmatprep.subr.bf16.mxu0 0
        %722 = vmatpush2.bf16.msra.mxu0 %v625
        %723 = vmatprep.subr.bf16.mxu0 0
        %724 = vmatpush2.bf16.msra.mxu0 %v624
        %725 = vmatprep.subr.bf16.mxu0 0
        %726 = vmatpush2.bf16.msra.mxu0 %v623
        %727 = vmatprep.subr.bf16.mxu0 0
        %728 = vmatpush2.bf16.msra.mxu0 %v622
        %729 = vmatprep.subr.bf16.mxu0 0
        %730 = vmatpush2.bf16.msra.mxu0 %v621
        %731 = vmatprep.subr.bf16.mxu0 0
        %732 = vmatpush2.bf16.msra.mxu0 %v620
        %733 = vmatprep.mubr.bf16.mxu0 %v463
        %734 = vmatmul.mubr.bf16.gmra.mxu0 %v462
        %v735 = vpop.f32.mrf.mxu0
        %v736 = vadd.f32 %v695, %v735
        %v737 = vpop.f32.mrf.mxu0
        %v738 = vpop.f32.mrf.mxu0
        %v739 = vadd.f32 %v698, %v738
        %v740 = vpop.f32.mrf.mxu0
        %741 = vdwg.mxu0
        %v742 = vadd.f32 %v378, %v736
        %v743 = vadd.f32 %v379, %v739
        %744 = vst [vmem:[#allocation2] sm:$0xff] %v742
        %745 = vst [vmem:[#allocation2 + $0x8] sm:$0xff] %v743
        %p746 = scmp.eq.s32.totalorder %s32, 1
        // Predicated region
        $region57: #{tpu_custom_call.1} parent=39 // pred_check
          %p747 = pneg %p746
        $region58: #{tpu_custom_call.1} parent=39 // pred_check_branch
          %749 = sbr.rel (%p747) target = $region60
        $region59: #{tpu_custom_call.1} parent=39 // pred_region
          %v750 = vld [vmem:[#allocation2] sm:$0xff]
          %v751 = vld [vmem:[#allocation2 + $0x8] sm:$0xff]
          %v752 = vld [vmem:[%s2] sm:$0x1]
          %v754 = vlaneseq
          %v755 = vshrl.u32 %v754, 7
          %v756 = vsub.s32 0, %v755
          %v757 = vrot.slane %v752, %v756
          %v759 = vadd.f32 %v750, %v757
          %v760 = vadd.f32 %v751, %v757
          %v761 = vmax.f32 %v759, 0.0
          %v762 = vmax.f32 %v760, 0.0
          %v763 = vpack.c.bf16 %v762, %v761
          %v764 = vld [vmem:[#allocation8] sm:$0xf]
          %v765 = vld [vmem:[#allocation8 + $0x4] sm:$0xf]
          %v766 = vld [vmem:[#allocation8 + $0x8] sm:$0xf]
          %v767 = vld [vmem:[#allocation8 + $0xc] sm:$0xf]
          %v768 = vld [vmem:[#allocation8 + $0x10] sm:$0xf]
          %v769 = vld [vmem:[#allocation8 + $0x14] sm:$0xf]
          %v770 = vld [vmem:[#allocation8 + $0x18] sm:$0xf]
          %v771 = vld [vmem:[#allocation8 + $0x1c] sm:$0xf]
          %v772 = vld [vmem:[#allocation8 + $0x20] sm:$0xf]
          %v773 = vld [vmem:[#allocation8 + $0x24] sm:$0xf]
          %v774 = vld [vmem:[#allocation8 + $0x28] sm:$0xf]
          %v775 = vld [vmem:[#allocation8 + $0x2c] sm:$0xf]
          %v776 = vld [vmem:[#allocation8 + $0x30] sm:$0xf]
          %v777 = vld [vmem:[#allocation8 + $0x34] sm:$0xf]
          %v778 = vld [vmem:[#allocation8 + $0x38] sm:$0xf]
          %v779 = vld [vmem:[#allocation8 + $0x3c] sm:$0xf]
          %v780 = vld [vmem:[%s4] sm:$0x1]
          %v782 = vlaneseq
          %v783 = vshrl.u32 %v782, 7
          %v784 = vsub.s32 0, %v783
          %v785 = vrot.slane %v780, %v784
          %v803 = vunpack.c.l.b16 %v764
          %v804 = vunpack.c.l.b16 %v765
          %v805 = vunpack.c.l.b16 %v766
          %v806 = vunpack.c.l.b16 %v767
          %v807 = vunpack.c.l.b16 %v768
          %v808 = vunpack.c.l.b16 %v769
          %v809 = vunpack.c.l.b16 %v770
          %v810 = vunpack.c.l.b16 %v771
          %v811 = vunpack.c.l.b16 %v772
          %v812 = vunpack.c.l.b16 %v773
          %v813 = vunpack.c.l.b16 %v774
          %v814 = vunpack.c.l.b16 %v775
          %v815 = vunpack.c.l.b16 %v776
          %v816 = vunpack.c.l.b16 %v777
          %v817 = vunpack.c.l.b16 %v778
          %v818 = vunpack.c.l.b16 %v779
          %v819 = vpack.c.b16 %v804, %v803
          %v820 = vpack.c.b16 %v806, %v805
          %v821 = vpack.c.b16 %v808, %v807
          %v822 = vpack.c.b16 %v810, %v809
          %v823 = vpack.c.b16 %v812, %v811
          %v824 = vpack.c.b16 %v814, %v813
          %v825 = vpack.c.b16 %v816, %v815
          %v826 = vpack.c.b16 %v818, %v817
          %835 = vmatprep.subr.bf16.mxu0 0
          %836 = vmatpush1.bf16.msra.mxu0 %v826
          %837 = vmatprep.subr.bf16.mxu0 0
          %838 = vmatpush1.bf16.msra.mxu0 %v825
          %839 = vmatprep.subr.bf16.mxu0 0
          %840 = vmatpush1.bf16.msra.mxu0 %v824
          %841 = vmatprep.subr.bf16.mxu0 0
          %842 = vmatpush1.bf16.msra.mxu0 %v823
          %843 = vmatprep.subr.bf16.mxu0 0
          %844 = vmatpush1.bf16.msra.mxu0 %v822
          %845 = vmatprep.subr.bf16.mxu0 0
          %846 = vmatpush1.bf16.msra.mxu0 %v821
          %847 = vmatprep.subr.bf16.mxu0 0
          %848 = vmatpush1.bf16.msra.mxu0 %v820
          %849 = vmatprep.subr.bf16.mxu0 0
          %850 = vmatpush1.bf16.msra.mxu0 %v819
          %851 = vmatprep.subr.bf16.mxu0 0
          %852 = vmatpush2.bf16.msra.mxu0 0
          %853 = vmatprep.subr.bf16.mxu0 0
          %854 = vmatpush2.bf16.msra.mxu0 0
          %855 = vmatprep.subr.bf16.mxu0 0
          %856 = vmatpush2.bf16.msra.mxu0 0
          %857 = vmatprep.subr.bf16.mxu0 0
          %858 = vmatpush2.bf16.msra.mxu0 0
          %859 = vmatprep.subr.bf16.mxu0 0
          %860 = vmatpush2.bf16.msra.mxu0 0
          %861 = vmatprep.subr.bf16.mxu0 0
          %862 = vmatpush2.bf16.msra.mxu0 0
          %863 = vmatprep.subr.bf16.mxu0 0
          %864 = vmatpush2.bf16.msra.mxu0 0
          %865 = vmatprep.subr.bf16.mxu0 0
          %866 = vmatpush2.bf16.msra.mxu0 0
          %867 = vmatprep.mubr.bf16.mxu0 0
          %868 = vmatmul.mubr.bf16.gmra.mxu0 %v763
          %v869 = vpop.f32.mrf.mxu0
          %v870 = vadd.f32 %v785, %v869
          %v871 = vpop.f32.mrf.mxu0
          %v872 = vpop.f32.mrf.mxu0
          %v873 = vadd.f32 %v785, %v872
          %v874 = vpop.f32.mrf.mxu0
          %875 = vdwg.mxu0
          %s876 = smul.u32 %s31, 16
          %v877 = vlaneseq
          %v878 = vshrl.u32 %v877, 7
          %v879 = vadd.s32 %v878, 8
          %v880 = vstv %s876
          %v881 = vadd.s32 %v880, %v878
          %v882 = vadd.s32 %v880, %v879
          %vm883 = vcmp.lt.s32.totalorder %v881, 2
          %vm884 = vcmp.lt.s32.totalorder %v882, 2
          %v885 = vsel %vm883, %v870, 0.0
          %v886 = vsel %vm884, %v873, 0.0
          %v887 = vadd.f32 %v885, %v886
          %v888 = vrot.slane %v887, 4
          %v889 = vadd.f32 %v887, %v888
          %v890 = vrot.slane %v889, 2
          %v891 = vadd.f32 %v889, %v890
          %v892 = vrot.slane %v891, 1
          %v893 = vadd.f32 %v891, %v892
          %894 = vst [vmem:[#allocation10] sm:$0x1] %v893
          %v895 = vmul.f32 %v885, %v870
          %v896 = vmul.f32 %v886, %v873
          %v897 = vadd.f32 %v895, %v896
          %v898 = vrot.slane %v897, 4
          %v899 = vadd.f32 %v897, %v898
          %v900 = vrot.slane %v899, 2
          %v901 = vadd.f32 %v899, %v900
          %v902 = vrot.slane %v901, 1
          %v903 = vadd.f32 %v901, %v902
          %904 = vst [vmem:[#allocation12] sm:$0x1] %v903
          %v905 = vpack.c.bf16 %v873, %v870
          %v907 = vunpack.c.l.b16 %v905
          %v908 = vunpack.c.h.b16 %v905
          %v909 = vpack.c.b16 %v907, %v907
          %v910 = vpack.c.b16 %v908, %v908
          %913 = vst [vmem:[#allocation9] sm:$0xf] %v909
          %914 = vst [vmem:[#allocation9 + $0x4] sm:$0xf] %v910
        $region60: #{tpu_custom_call.1} parent=39 // pred_fallthru
          _
        // Predicated region
        $region61: #{tpu_custom_call.1} parent=39 // pred_check
          %p915 = pneg %p174
        $region62: #{tpu_custom_call.1} parent=39 // pred_check_branch
          %917 = sbr.rel (%p915) target = $region64
        $region63: #{tpu_custom_call.1} parent=39 // pred_region
          %s918 = smul.u32 2, %s31
          %s920 = ssub.s32 128, 128
          %921 = vsyncadd [#allocation5], %s920
          %s922 = smul.addr %s918, 64
          %s923 = scalar_lea.hbm %s5, %s922
          %s924 = sshll.u32 [#allocation9], 4
          %s925 = int_to_ptr.vmem [resolvable:$true] %s924
          %930 = dma.vmem_to_hbm [thread:$0]  %s925, 128, %s923, [#allocation5], 64, 64, 4
        $region64: #{tpu_custom_call.1} parent=39 // pred_fallthru
          _
        // Predicated region
        $region65: #{tpu_custom_call.1} parent=39 // pred_check
          %p931 = pneg %p200
        $region66: #{tpu_custom_call.1} parent=39 // pred_check_branch
          %933 = sbr.rel (%p931) target = $region68
        $region67: #{tpu_custom_call.1} parent=39 // pred_region
          %s935 = ssub.s32 16, 16
          %936 = vsyncadd [#allocation11], %s935
          %s937 = smul.addr %s31, 16
          %s938 = scalar_lea.hbm %s6, %s937
          %s940 = sshll.u32 [#allocation10], 4
          %s941 = int_to_ptr.vmem [resolvable:$true] %s940
          %943 = dma.vmem_to_hbm [thread:$0]  %s941, 16, %s938, [#allocation11]
        $region68: #{tpu_custom_call.1} parent=39 // pred_fallthru
          _
        // Predicated region
        $region69: #{tpu_custom_call.1} parent=39 // pred_check
          %p944 = pneg %p226
        $region70: #{tpu_custom_call.1} parent=39 // pred_check_branch
          %946 = sbr.rel (%p944) target = $region72
        $region71: #{tpu_custom_call.1} parent=39 // pred_region
          %s948 = ssub.s32 16, 16
          %949 = vsyncadd [#allocation11], %s948
          %s950 = smul.addr %s31, 16
          %s951 = scalar_lea.hbm %s7, %s950
          %s953 = sshll.u32 [#allocation12], 4
          %s954 = int_to_ptr.vmem [resolvable:$true] %s953
          %956 = dma.vmem_to_hbm [thread:$0]  %s954, 16, %s951, [#allocation11]
        $region72: #{tpu_custom_call.1} parent=39 // pred_fallthru
          _
        // Predicated region
        $region73: #{tpu_custom_call.1} parent=39 // pred_check
          %p957 = pneg %p174
        $region74: #{tpu_custom_call.1} parent=39 // pred_check_branch
          %959 = sbr.rel (%p957) target = $region76
        $region75: #{tpu_custom_call.1} parent=39 // pred_region
          %960 = dma.done [#allocation5], 128
        $region76: #{tpu_custom_call.1} parent=39 // pred_fallthru
          _
        // Predicated region
        $region77: #{tpu_custom_call.1} parent=39 // pred_check
          %p961 = pneg %p200
        $region78: #{tpu_custom_call.1} parent=39 // pred_check_branch
          %963 = sbr.rel (%p961) target = $region80
        $region79: #{tpu_custom_call.1} parent=39 // pred_region
          %964 = dma.done [#allocation11], 16
        $region80: #{tpu_custom_call.1} parent=39 // pred_fallthru
          _
        // Predicated region
        $region81: #{tpu_custom_call.1} parent=39 // pred_check
          %p965 = pneg %p226
        $region82: #{tpu_custom_call.1} parent=39 // pred_check_branch
          %967 = sbr.rel (%p965) target = $region84
        $region83: #{tpu_custom_call.1} parent=39 // pred_region
          %968 = dma.done [#allocation11], 16
        $region84: #{tpu_custom_call.1} parent=39 // pred_fallthru
          _
      $region40: #{tpu_custom_call.1} parent=5 // pred_fallthru
        _
      %p969 = scmp.le.s32.totalorder 2, %s22
      // Predicated region
      $region85: #{tpu_custom_call.1} parent=5 // pred_check
        %p970 = pneg %p969
      $region86: #{tpu_custom_call.1} parent=5 // pred_check_branch
        %972 = sbr.rel (%p970) target = $region88
      $region87: #{tpu_custom_call.1} parent=5 // pred_region
        %s973 = ssub.s32 %s22, 2
      $region88: #{tpu_custom_call.1} parent=5 // pred_fallthru
        _
    $region6: #{tpu_custom_call.1} parent=1 // loop_footer
      %s26 = sadd.s32 1, %s22
    $region7: #{tpu_custom_call.1} parent=1 // loop_footer_branch
      %21 = sbr.rel target = $region3
    $region8: #{tpu_custom_call.1} parent=1 // loop_exit
      _
    %974 = vsyncpa [#allocation4], 1
    %s975 = scalar_lea.sflag [#allocation4], 1
    %976 = vsyncpa %s975, 1
    %977 = vsyncpa [#allocation7], 1
    %s978 = scalar_lea.sflag [#allocation7], 1
    %979 = vsyncpa %s978, 1
    %980 = vsyncpa [#allocation5], 1
    %s981 = scalar_lea.sflag [#allocation5], 1
    %982 = vsyncpa %s981, 1
    %983 = vsyncpa [#allocation11], 1

</llo_original>
